<compile_context>
chip_gen: v5e
topology: v5e:2x2
jax: 0.10.0
libtpu: 0.0.40
codegen_flags: <defaults>
</compile_context>

<pallas_src>
import functools

import jax
import jax.numpy as jnp
from jax.experimental import pallas as pl
from jax.experimental.pallas import tpu as pltpu


def _sage_layer_kernel(adj_ref, feat_k_ref, feat_i_ref, wl_ref, wr_ref,
                       out_ref, acc_ref, *, final_op, valid_out):
    """One fused SAGE layer over a (row-block i, adj-col-block k) grid.

    acc (f32) accumulates agg = adj_norm @ feat across the reduction axis k;
    at the last k the two weight matmuls + nonlinearity run and the lane-dense
    output block is written once.
    """
    k = pl.program_id(1)

    @pl.when(k == 0)
    def _():
        acc_ref[...] = jnp.zeros_like(acc_ref)

    # Mean-neighbor aggregation: bf16 adj tile (TM, TK) @ bf16 feature tile
    # (TK, F), accumulated in f32.
    acc_ref[...] += jnp.dot(adj_ref[...], feat_k_ref[...],
                            preferred_element_type=jnp.float32)

    @pl.when(k == pl.num_programs(1) - 1)
    def _():
        # Two accumulated MXU passes (no lane-axis concat copy):
        #   h = agg @ Wl.T + x_root @ Wr.T      (all bf16 operands, f32 acc)
        h = (jnp.dot(acc_ref[...].astype(jnp.bfloat16), wl_ref[...],
                     preferred_element_type=jnp.float32)
             + jnp.dot(feat_i_ref[...], wr_ref[...],
                       preferred_element_type=jnp.float32))
        if final_op == "relu":
            out_ref[...] = jnp.maximum(h, 0.0).astype(out_ref.dtype)
        else:  # "log_softmax": mask padded class lanes, then stable log_softmax
            lane = jax.lax.broadcasted_iota(jnp.int32, h.shape, 1)
            h = jnp.where(lane < valid_out, h, -1e30)
            m = jnp.max(h, axis=1, keepdims=True)
            z = h - m
            lse = jnp.log(jnp.sum(jnp.exp(z), axis=1, keepdims=True))
            out_ref[...] = (z - lse).astype(out_ref.dtype)


def _sage_layer(adj_p, feat_p, wl_p, wr_p, out_width, out_dtype, *,
                final_op, valid_out, tm, tk):
    """Gridded pallas_call for one fused SAGE layer on padded inputs."""
    n_pad = adj_p.shape[0]
    fdim = feat_p.shape[1]
    kernel = functools.partial(_sage_layer_kernel, final_op=final_op,
                               valid_out=valid_out)
    return pl.pallas_call(
        kernel,
        out_shape=jax.ShapeDtypeStruct((n_pad, out_width), out_dtype),
        grid_spec=pltpu.PrefetchScalarGridSpec(
            num_scalar_prefetch=0,
            grid=(n_pad // tm, n_pad // tk),
            in_specs=[
                pl.BlockSpec((tm, tk), lambda i, k: (i, k)),          # adj tile
                pl.BlockSpec((tk, fdim), lambda i, k: (k, 0)),        # neighbor feats
                pl.BlockSpec((tm, fdim), lambda i, k: (i, 0)),        # root feats
                pl.BlockSpec((fdim, out_width), lambda i, k: (0, 0)),  # Wl.T
                pl.BlockSpec((fdim, out_width), lambda i, k: (0, 0)),  # Wr.T
            ],
            out_specs=pl.BlockSpec((tm, out_width), lambda i, k: (i, 0)),
            scratch_shapes=[pltpu.VMEM((tm, fdim), jnp.float32)],
        ),
        compiler_params=pltpu.CompilerParams(
            dimension_semantics=("parallel", "arbitrary")),
    )(adj_p, feat_p, feat_p, wl_p, wr_p)


def _round_up(v, m):
    return (v + m - 1) // m * m


def _pad2(a, rows, cols):
    return jnp.pad(a, ((0, rows - a.shape[0]), (0, cols - a.shape[1])))


def _pick_tile(n_pad, req):
    """Largest multiple of 128 that divides n_pad and is <= req (>=128)."""
    t = max(128, (min(req, n_pad) // 128) * 128)
    while n_pad % t != 0:
        t -= 128
    return t


def model_forward(x, edge_index, params, *, tm=256, tk=512):
    """x: (N, in_channels) float32, edge_index: (2, E) int32 (src, dst)."""
    n, in_ch = x.shape
    wl1, wr1, wl2, wr2, wlin = params
    hid = wl1.shape[0]
    out_ch = wlin.shape[0]

    # Pad to MXU/vreg-friendly sizes (lane-dense stores, full MXU tiles).
    n_pad = _round_up(n, 128)
    in_p = _round_up(in_ch, 128)
    hid_p = _round_up(hid, 128)
    out_p = _round_up(out_ch, 128)

    # Tile selection: large streamed tiles (HBM roofline, fewer grid steps),
    # but always dividing n_pad; ensure >=2 row blocks when possible so the
    # "parallel" axis shards across both TensorCores on v7x.
    tm = _pick_tile(n_pad, tm)
    tk = _pick_tile(n_pad, tk)
    if n_pad // tm < 2 and n_pad >= 256:
        tm = _pick_tile(n_pad, n_pad // 2)

    # Dense row-normalized adjacency for mean aggregation (glue, plain JAX).
    # Degrees via a 1-D scatter; edge values pre-scaled by 1/deg (no dense
    # NxN row-sum).
    src, dst = edge_index[0], edge_index[1]
    deg = jnp.zeros((n,), dtype=jnp.float32).at[dst].add(1.0)
    inv_deg = 1.0 / jnp.maximum(deg, 1.0)
    adj_norm = jnp.zeros((n, n), dtype=jnp.float32).at[dst, src].add(inv_deg[dst])
    adj_p = _pad2(adj_norm, n_pad, n_pad).astype(jnp.bfloat16)

    x_p = _pad2(x.astype(jnp.float32), n_pad, in_p).astype(jnp.bfloat16)

    # Layer-1 weights (neighbor / root), padded + bf16.
    wl1_p = _pad2(wl1.T, in_p, hid_p).astype(jnp.bfloat16)
    wr1_p = _pad2(wr1.T, in_p, hid_p).astype(jnp.bfloat16)

    # Layer 2 with the final Linear folded in (no activation between them):
    #   logits = agg1 @ (Wl2.T @ Wlin.T) + h1 @ (Wr2.T @ Wlin.T)
    wl2_p = _pad2(wl2.T @ wlin.T, hid_p, out_p).astype(jnp.bfloat16)
    wr2_p = _pad2(wr2.T @ wlin.T, hid_p, out_p).astype(jnp.bfloat16)

    # Layer 1 writes bf16 so layer 2 streams half the feature bytes.
    h1_p = _sage_layer(adj_p, x_p, wl1_p, wr1_p, hid_p, jnp.bfloat16,
                       final_op="relu", valid_out=hid, tm=tm, tk=tk)
    out_full = _sage_layer(adj_p, h1_p, wl2_p, wr2_p, out_p, jnp.float32,
                           final_op="log_softmax", valid_out=out_ch,
                           tm=tm, tk=tk)
    return out_full[:n, :out_ch]


def init_params(key, in_channels, hidden_channels, out_channels):
    ks = jax.random.split(key, 5)

    def glorot(k, shape):
        fan_in, fan_out = shape[1], shape[0]
        lim = (6.0 / (fan_in + fan_out)) ** 0.5
        return jax.random.uniform(k, shape, jnp.float32, -lim, lim)

    # SAGEConv1: lin_l (neighbor), lin_r (root): (hidden, in)
    wl1 = glorot(ks[0], (hidden_channels, in_channels))
    wr1 = glorot(ks[1], (hidden_channels, in_channels))
    # SAGEConv2: (hidden, hidden)
    wl2 = glorot(ks[2], (hidden_channels, hidden_channels))
    wr2 = glorot(ks[3], (hidden_channels, hidden_channels))
    # Final linear: (out, hidden)
    wlin = glorot(ks[4], (out_channels, hidden_channels))
    return (wl1, wr1, wl2, wr2, wlin)


def reference_forward(x, edge_index, params):
    """Pure-JAX f32 reference: PyG GraphSAGE(mean) + Linear + log_softmax."""
    n = x.shape[0]
    src, dst = edge_index[0], edge_index[1]
    adj = jnp.zeros((n, n), dtype=jnp.float32).at[dst, src].add(1.0)
    deg = jnp.sum(adj, axis=1, keepdims=True)
    adj_norm = adj / jnp.maximum(deg, 1.0)
    wl1, wr1, wl2, wr2, wlin = params

    h1 = jax.nn.relu(adj_norm @ x @ wl1.T + x @ wr1.T)
    h2 = adj_norm @ h1 @ wl2.T + h1 @ wr2.T
    logits = h2 @ wlin.T
    return jax.nn.log_softmax(logits, axis=1)


if __name__ == "__main__":
    key = jax.random.PRNGKey(0)
    k_x, k_p = jax.random.split(key)

    N = 16            # number of graph nodes
    IN_CH = 8         # in_channels
    HID = 32          # hidden_channels
    OUT_CH = 4        # out_channels (classes)

    x = jax.random.normal(k_x, (N, IN_CH), dtype=jnp.float32)

    # Deterministic small graph: ring + a few long-range edges (directed both ways).
    ring_src = jnp.arange(N, dtype=jnp.int32)
    ring_dst = (ring_src + 1) % N
    extra_src = jnp.array([0, 3, 7, 12], dtype=jnp.int32)
    extra_dst = jnp.array([8, 11, 2, 5], dtype=jnp.int32)
    src = jnp.concatenate([ring_src, ring_dst, extra_src, extra_dst])
    dst = jnp.concatenate([ring_dst, ring_src, extra_dst, extra_src])
    edge_index = jnp.stack([src, dst]).astype(jnp.int32)

    params = init_params(k_p, IN_CH, HID, OUT_CH)

    out = model_forward(x, edge_index, params)
    out = jax.block_until_ready(out)

    ref = reference_forward(x, edge_index, params)
    assert out.shape == (N, OUT_CH)
    # bf16 operands with f32 accumulation: compare with loosened tolerance.
    assert jnp.allclose(out, ref, atol=1e-1, rtol=1e-1), "mismatch vs reference"

    print("KERNEL_OK")
</pallas_src>

<mosaic_0001>
module attributes {stable_mosaic.version = 11 : i64} {
  func.func @_sage_layer_kernel(%arg0: i32, %arg1: i32, %arg2: memref<128x128xbf16, #tpu.memory_space<vmem>>, %arg3: memref<128x128xbf16, #tpu.memory_space<vmem>>, %arg4: memref<128x128xbf16, #tpu.memory_space<vmem>>, %arg5: memref<128x128xbf16, #tpu.memory_space<vmem>>, %arg6: memref<128x128xbf16, #tpu.memory_space<vmem>>, %arg7: memref<128x128xbf16, #tpu.memory_space<vmem>>, %arg8: memref<128x128xf32, #tpu.memory_space<vmem>>) attributes {dimension_semantics = [#tpu.dimension_semantics<parallel>, #tpu.dimension_semantics<arbitrary>], iteration_bounds = array<i64: 1, 1>, scalar_prefetch = 0 : i64, scratch_operands = 1 : i64, tpu.core_type = #tpu.core_type<tc>, window_params = [{transform_indices = @transform_0, window_bounds = array<i64: 128, 128>}, {transform_indices = @transform_1, window_bounds = array<i64: 128, 128>}, {transform_indices = @transform_2, window_bounds = array<i64: 128, 128>}, {pipeline_mode = #tpu.pipeline_mode<synchronous>, transform_indices = @transform_3, window_bounds = array<i64: 128, 128>}, {pipeline_mode = #tpu.pipeline_mode<synchronous>, transform_indices = @transform_4, window_bounds = array<i64: 128, 128>}, {transform_indices = @transform_5, window_bounds = array<i64: 128, 128>}]} {
    %c0_i32 = arith.constant 0 : i32
    %0 = arith.cmpi eq, %arg1, %c0_i32 : i32
    %1 = arith.extui %0 : i1 to i32
    %c0_i32_0 = arith.constant 0 : i32
    %2 = arith.cmpi ne, %1, %c0_i32_0 : i32
    scf.if %2 {
      %cst_10 = arith.constant 0.000000e+00 : f32
      %12 = vector.broadcast %cst_10 : f32 to vector<128x128xf32>
      %c0_11 = arith.constant 0 : index
      %c0_12 = arith.constant 0 : index
      %13 = vector.load %arg8[%c0_11, %c0_12] : memref<128x128xf32, #tpu.memory_space<vmem>>, vector<128x128xf32>
      tpu.vector_store %arg8[%c0_11, %c0_12], %12 {strides = array<i32>} : memref<128x128xf32, #tpu.memory_space<vmem>>, vector<128x128xf32>,
    } else {
    }
    %c0 = arith.constant 0 : index
    %c0_1 = arith.constant 0 : index
    %3 = vector.load %arg8[%c0, %c0_1] : memref<128x128xf32, #tpu.memory_space<vmem>>, vector<128x128xf32>
    %c0_2 = arith.constant 0 : index
    %c0_3 = arith.constant 0 : index
    %4 = vector.load %arg2[%c0_2, %c0_3] : memref<128x128xbf16, #tpu.memory_space<vmem>>, vector<128x128xbf16>
    %c0_4 = arith.constant 0 : index
    %c0_5 = arith.constant 0 : index
    %5 = vector.load %arg3[%c0_4, %c0_5] : memref<128x128xbf16, #tpu.memory_space<vmem>>, vector<128x128xbf16>
    %cst = arith.constant dense<0.000000e+00> : vector<128x128xf32>
    %6 = tpu.matmul %4, %5, %cst {dimension_numbers = #tpu.dot_dimension_numbers<[1], [0], [0], [1], [0, 0, 1, 1], [], []>} : vector<128x128xbf16>, vector<128x128xbf16>, vector<128x128xf32> -> vector<128x128xf32>
    %7 = arith.addf %3, %6 : vector<128x128xf32>
    %c0_6 = arith.constant 0 : index
    %c0_7 = arith.constant 0 : index
    %8 = vector.load %arg8[%c0_6, %c0_7] : memref<128x128xf32, #tpu.memory_space<vmem>>, vector<128x128xf32>
    tpu.vector_store %arg8[%c0_6, %c0_7], %7 {strides = array<i32>} : memref<128x128xf32, #tpu.memory_space<vmem>>, vector<128x128xf32>,
    %c0_i32_8 = arith.constant 0 : i32
    %9 = arith.cmpi eq, %arg1, %c0_i32_8 : i32
    %10 = arith.extui %9 : i1 to i32
    %c0_i32_9 = arith.constant 0 : i32
    %11 = arith.cmpi ne, %10, %c0_i32_9 : i32
    scf.if %11 {
      %c0_10 = arith.constant 0 : index
      %c0_11 = arith.constant 0 : index
      %12 = vector.load %arg8[%c0_10, %c0_11] : memref<128x128xf32, #tpu.memory_space<vmem>>, vector<128x128xf32>
      %13 = arith.truncf %12 : vector<128x128xf32> to vector<128x128xbf16>
      %c0_12 = arith.constant 0 : index
      %c0_13 = arith.constant 0 : index
      %14 = vector.load %arg5[%c0_12, %c0_13] : memref<128x128xbf16, #tpu.memory_space<vmem>>, vector<128x128xbf16>
      %cst_14 = arith.constant dense<0.000000e+00> : vector<128x128xf32>
      %15 = tpu.matmul %13, %14, %cst_14 {dimension_numbers = #tpu.dot_dimension_numbers<[1], [0], [0], [1], [0, 0, 1, 1], [], []>} : vector<128x128xbf16>, vector<128x128xbf16>, vector<128x128xf32> -> vector<128x128xf32>
      %c0_15 = arith.constant 0 : index
      %c0_16 = arith.constant 0 : index
      %16 = vector.load %arg4[%c0_15, %c0_16] : memref<128x128xbf16, #tpu.memory_space<vmem>>, vector<128x128xbf16>
      %c0_17 = arith.constant 0 : index
      %c0_18 = arith.constant 0 : index
      %17 = vector.load %arg6[%c0_17, %c0_18] : memref<128x128xbf16, #tpu.memory_space<vmem>>, vector<128x128xbf16>
      %cst_19 = arith.constant dense<0.000000e+00> : vector<128x128xf32>
      %18 = tpu.matmul %16, %17, %cst_19 {dimension_numbers = #tpu.dot_dimension_numbers<[1], [0], [0], [1], [0, 0, 1, 1], [], []>} : vector<128x128xbf16>, vector<128x128xbf16>, vector<128x128xf32> -> vector<128x128xf32>
      %19 = arith.addf %15, %18 : vector<128x128xf32>
      %cst_20 = arith.constant 0.000000e+00 : f32
      %20 = vector.broadcast %cst_20 : f32 to vector<128x128xf32>
      %21 = arith.maximumf %19, %20 : vector<128x128xf32>
      %22 = arith.truncf %21 : vector<128x128xf32> to vector<128x128xbf16>
      %c0_21 = arith.constant 0 : index
      %c0_22 = arith.constant 0 : index
      %23 = vector.load %arg7[%c0_21, %c0_22] : memref<128x128xbf16, #tpu.memory_space<vmem>>, vector<128x128xbf16>
      tpu.vector_store %arg7[%c0_21, %c0_22], %22 {strides = array<i32>} : memref<128x128xbf16, #tpu.memory_space<vmem>>, vector<128x128xbf16>,
    } else {
    }
    return
  }
  func.func @transform_0(%arg0: i32, %arg1: i32) -> (i32, i32) {
    %c0_i32 = arith.constant 0 : i32
    return %arg0, %arg1 : i32, i32
  }
  func.func @transform_1(%arg0: i32, %arg1: i32) -> (i32, i32) {
    %c0_i32 = arith.constant 0 : i32
    %c0_i32_0 = arith.constant 0 : i32
    return %arg1, %c0_i32 : i32, i32
  }
  func.func @transform_2(%arg0: i32, %arg1: i32) -> (i32, i32) {
    %c0_i32 = arith.constant 0 : i32
    %c0_i32_0 = arith.constant 0 : i32
    return %arg0, %c0_i32 : i32, i32
  }
  func.func @transform_3(%arg0: i32, %arg1: i32) -> (i32, i32) {
    %c0_i32 = arith.constant 0 : i32
    %c0_i32_0 = arith.constant 0 : i32
    %c0_i32_1 = arith.constant 0 : i32
    return %c0_i32, %c0_i32_0 : i32, i32
  }
  func.func @transform_4(%arg0: i32, %arg1: i32) -> (i32, i32) {
    %c0_i32 = arith.constant 0 : i32
    %c0_i32_0 = arith.constant 0 : i32
    %c0_i32_1 = arith.constant 0 : i32
    return %c0_i32, %c0_i32_0 : i32, i32
  }
  func.func @transform_5(%arg0: i32, %arg1: i32) -> (i32, i32) {
    %c0_i32 = arith.constant 0 : i32
    %c0_i32_0 = arith.constant 0 : i32
    return %arg0, %c0_i32 : i32, i32
  }
}

</mosaic_0001>

<llo_original>
// kernel: tpu_custom_call.1
$region0: #{tpu_custom_call.1}
  #allocation0 [shape = 'u32[]', space=smem, size = 0x4, offset = 0x4, fixed_abs, tag = 'smem constant byte address 0x4 - core index']
  #allocation1 [shape = 'u32[72,128]{1,0:T(1,128)}', space=vmem, size = 0x9000, scoped, tag = 'internal scratch']
  #allocation2 [shape = 'f32[128,128]{1,0:T(8,128)}', space=vmem, size = 0x10000, scoped, tag = 'scratch operand']
  %s0 = inlined_call_operand.hbm [shape: bf16[128,128], index: 0, kind: input, shape index: {}]
  %s1 = inlined_call_operand.hbm [shape: bf16[128,128], index: 1, kind: input, shape index: {}]
  %s2 = inlined_call_operand.hbm [shape: bf16[128,128], index: 2, kind: input, shape index: {}]
  %s3 = inlined_call_operand.hbm [shape: bf16[128,128], index: 3, kind: input, shape index: {}]
  %s4 = inlined_call_operand.hbm [shape: bf16[128,128], index: 4, kind: input, shape index: {}]
  %s5 = inlined_call_operand.hbm [shape: bf16[128,128], index: 5, kind: output, shape index: {}]
  %s6 = sld [smem:[#allocation0]]
  $region58: #{tpu_custom_call.1} parent=0
    _
  %s8 = ssub.s32 1, %s6
  %s9 = scalar_select 0, %s8, %s6
  $region1: #{tpu_custom_call.1} parent=0
    #allocation3 [shape = 'u8[32768]{0}', space=vmem, size = 0x8000, scoped, tag = 'input window, operand 0, single buffered']
    #allocation4 [shape = 's32[1]{0}', space=sflag, size = 0x4, scoped, tag = 'scoped memory for tpu_custom_call.1']
    #allocation5 [shape = 's32[1]{0}', space=sflag, size = 0x4, scoped, tag = 'scoped memory for tpu_custom_call.1']
    #allocation6 [shape = 'u8[32768]{0}', space=vmem, size = 0x8000, scoped, tag = 'input window, operand 1, single buffered']
    #allocation7 [shape = 's32[1]{0}', space=sflag, size = 0x4, scoped, tag = 'scoped memory for tpu_custom_call.1']
    #allocation8 [shape = 'u8[32768]{0}', space=vmem, size = 0x8000, scoped, tag = 'input window, operand 2, single buffered']
    #allocation9 [shape = 'u8[32768]{0}', space=vmem, size = 0x8000, scoped, tag = 'input window, operand 3, single buffered']
    #allocation10 [shape = 's32[1]{0}', space=sflag, size = 0x4, scoped, tag = 'scoped memory for tpu_custom_call.1']
    #allocation11 [shape = 'u8[32768]{0}', space=vmem, size = 0x8000, scoped, tag = 'input window, operand 4, single buffered']
    #allocation12 [shape = 'u8[32768]{0}', space=vmem, size = 0x8000, scoped, tag = 'output window, operand 0, single buffered']
    %10 = vsyncpa [#allocation4], 0
    %11 = vsyncpa [#allocation7], 0
    %12 = vsyncpa [#allocation10], 0
    %13 = vsyncpa [#allocation5], 0
    // Predicated region
    $region2: #{tpu_custom_call.1} parent=1 // pred_check
      _
    $region3: #{tpu_custom_call.1} parent=1 // pred_check_branch
      %15 = sbr.rel (0) target = $region5
    $region4: #{tpu_custom_call.1} parent=1 // pred_region
      %17 = vsyncadd [#allocation4], 0
      %s18 = sshll.u32 %s0, 4
      %s19 = int_to_ptr.hbm [resolvable:$true] %s18
      %s20 = sshll.u32 [#allocation3], 4
      %s21 = int_to_ptr.vmem [resolvable:$true] %s20
      %26 = dma.hbm_to_vmem [thread:$0]  %s19, 1024, %s21, [#allocation4], 64, 64, 4
    $region5: #{tpu_custom_call.1} parent=1 // pred_fallthru
      _
    // Predicated region
    $region6: #{tpu_custom_call.1} parent=1 // pred_check
      _
    $region7: #{tpu_custom_call.1} parent=1 // pred_check_branch
      %28 = sbr.rel (0) target = $region9
    $region8: #{tpu_custom_call.1} parent=1 // pred_region
      %30 = vsyncadd [#allocation7], 0
      %s31 = sshll.u32 %s1, 4
      %s32 = int_to_ptr.hbm [resolvable:$true] %s31
      %s33 = sshll.u32 [#allocation6], 4
      %s34 = int_to_ptr.vmem [resolvable:$true] %s33
      %39 = dma.hbm_to_vmem [thread:$0]  %s32, 1024, %s34, [#allocation7], 64, 64, 4
    $region9: #{tpu_custom_call.1} parent=1 // pred_fallthru
      _
    // Predicated region
    $region10: #{tpu_custom_call.1} parent=1 // pred_check
      _
    $region11: #{tpu_custom_call.1} parent=1 // pred_check_branch
      %41 = sbr.rel (0) target = $region13
    $region12: #{tpu_custom_call.1} parent=1 // pred_region
      %43 = vsyncadd [#allocation7], 0
      %s44 = sshll.u32 %s2, 4
      %s45 = int_to_ptr.hbm [resolvable:$true] %s44
      %s46 = sshll.u32 [#allocation8], 4
      %s47 = int_to_ptr.vmem [resolvable:$true] %s46
      %52 = dma.hbm_to_vmem [thread:$0]  %s45, 1024, %s47, [#allocation7], 64, 64, 4
    $region13: #{tpu_custom_call.1} parent=1 // pred_fallthru
      _
    // Predicated region
    $region14: #{tpu_custom_call.1} parent=1 // pred_check
      _
    $region15: #{tpu_custom_call.1} parent=1 // pred_check_branch
      %54 = sbr.rel (0) target = $region17
    $region16: #{tpu_custom_call.1} parent=1 // pred_region
      %56 = vsyncadd [#allocation10], 0
      %s57 = sshll.u32 %s3, 4
      %s58 = int_to_ptr.hbm [resolvable:$true] %s57
      %s59 = sshll.u32 [#allocation9], 4
      %s60 = int_to_ptr.vmem [resolvable:$true] %s59
      %65 = dma.hbm_to_vmem [thread:$0]  %s58, 1024, %s60, [#allocation10], 64, 64, 4
    $region17: #{tpu_custom_call.1} parent=1 // pred_fallthru
      _
    // Predicated region
    $region18: #{tpu_custom_call.1} parent=1 // pred_check
      _
    $region19: #{tpu_custom_call.1} parent=1 // pred_check_branch
      %67 = sbr.rel (0) target = $region21
    $region20: #{tpu_custom_call.1} parent=1 // pred_region
      %69 = vsyncadd [#allocation10], 0
      %s70 = sshll.u32 %s4, 4
      %s71 = int_to_ptr.hbm [resolvable:$true] %s70
      %s72 = sshll.u32 [#allocation11], 4
      %s73 = int_to_ptr.vmem [resolvable:$true] %s72
      %78 = dma.hbm_to_vmem [thread:$0]  %s71, 1024, %s73, [#allocation10], 64, 64, 4
    $region21: #{tpu_custom_call.1} parent=1 // pred_fallthru
      _
    // Predicated region
    $region22: #{tpu_custom_call.1} parent=1 // pred_check
      _
    $region23: #{tpu_custom_call.1} parent=1 // pred_check_branch
      %80 = sbr.rel (0) target = $region25
    $region24: #{tpu_custom_call.1} parent=1 // pred_region
      %82 = dma.done [#allocation4], 1024
    $region25: #{tpu_custom_call.1} parent=1 // pred_fallthru
      _
    // Predicated region
    $region26: #{tpu_custom_call.1} parent=1 // pred_check
      _
    $region27: #{tpu_custom_call.1} parent=1 // pred_check_branch
      %84 = sbr.rel (0) target = $region29
    $region28: #{tpu_custom_call.1} parent=1 // pred_region
      %86 = dma.done [#allocation7], 1024
    $region29: #{tpu_custom_call.1} parent=1 // pred_fallthru
      _
    // Predicated region
    $region30: #{tpu_custom_call.1} parent=1 // pred_check
      _
    $region31: #{tpu_custom_call.1} parent=1 // pred_check_branch
      %88 = sbr.rel (0) target = $region33
    $region32: #{tpu_custom_call.1} parent=1 // pred_region
      %90 = dma.done [#allocation7], 1024
    $region33: #{tpu_custom_call.1} parent=1 // pred_fallthru
      _
    // Predicated region
    $region34: #{tpu_custom_call.1} parent=1 // pred_check
      _
    $region35: #{tpu_custom_call.1} parent=1 // pred_check_branch
      %92 = sbr.rel (0) target = $region37
    $region36: #{tpu_custom_call.1} parent=1 // pred_region
      %94 = dma.done [#allocation10], 1024
    $region37: #{tpu_custom_call.1} parent=1 // pred_fallthru
      _
    // Predicated region
    $region38: #{tpu_custom_call.1} parent=1 // pred_check
      _
    $region39: #{tpu_custom_call.1} parent=1 // pred_check_branch
      %96 = sbr.rel (0) target = $region41
    $region40: #{tpu_custom_call.1} parent=1 // pred_region
      %98 = dma.done [#allocation10], 1024
    $region41: #{tpu_custom_call.1} parent=1 // pred_fallthru
      _
    %p99 = scmp.eq.s32.totalorder 0, 0
    // Predicated region
    $region42: #{tpu_custom_call.1} parent=1 // pred_check
      %p100 = pneg %p99
    $region43: #{tpu_custom_call.1} parent=1 // pred_check_branch
      %102 = sbr.rel (%p100) target = $region45
    $region44: #{tpu_custom_call.1} parent=1 // pred_region
      %103 = vst [vmem:[#allocation2] sm:$0xff] 0.0
      %104 = vst [vmem:[#allocation2 + $0x8] sm:$0xff] 0.0
      %105 = vst [vmem:[#allocation2 + $0x10] sm:$0xff] 0.0
      %106 = vst [vmem:[#allocation2 + $0x18] sm:$0xff] 0.0
      %107 = vst [vmem:[#allocation2 + $0x20] sm:$0xff] 0.0
      %108 = vst [vmem:[#allocation2 + $0x28] sm:$0xff] 0.0
      %109 = vst [vmem:[#allocation2 + $0x30] sm:$0xff] 0.0
      %110 = vst [vmem:[#allocation2 + $0x38] sm:$0xff] 0.0
      %111 = vst [vmem:[#allocation2 + $0x40] sm:$0xff] 0.0
      %112 = vst [vmem:[#allocation2 + $0x48] sm:$0xff] 0.0
      %113 = vst [vmem:[#allocation2 + $0x50] sm:$0xff] 0.0
      %114 = vst [vmem:[#allocation2 + $0x58] sm:$0xff] 0.0
      %115 = vst [vmem:[#allocation2 + $0x60] sm:$0xff] 0.0
      %116 = vst [vmem:[#allocation2 + $0x68] sm:$0xff] 0.0
      %117 = vst [vmem:[#allocation2 + $0x70] sm:$0xff] 0.0
      %118 = vst [vmem:[#allocation2 + $0x78] sm:$0xff] 0.0
    $region45: #{tpu_custom_call.1} parent=1 // pred_fallthru
      _
    %v119 = vld [vmem:[#allocation2] sm:$0xff]
    %v120 = vld [vmem:[#allocation2 + $0x8] sm:$0xff]
    %v121 = vld [vmem:[#allocation2 + $0x10] sm:$0xff]
    %v122 = vld [vmem:[#allocation2 + $0x18] sm:$0xff]
    %v123 = vld [vmem:[#allocation2 + $0x20] sm:$0xff]
    %v124 = vld [vmem:[#allocation2 + $0x28] sm:$0xff]
    %v125 = vld [vmem:[#allocation2 + $0x30] sm:$0xff]
    %v126 = vld [vmem:[#allocation2 + $0x38] sm:$0xff]
    %v127 = vld [vmem:[#allocation2 + $0x40] sm:$0xff]
    %v128 = vld [vmem:[#allocation2 + $0x48] sm:$0xff]
    %v129 = vld [vmem:[#allocation2 + $0x50] sm:$0xff]
    %v130 = vld [vmem:[#allocation2 + $0x58] sm:$0xff]
    %v131 = vld [vmem:[#allocation2 + $0x60] sm:$0xff]
    %v132 = vld [vmem:[#allocation2 + $0x68] sm:$0xff]
    %v133 = vld [vmem:[#allocation2 + $0x70] sm:$0xff]
    %v134 = vld [vmem:[#allocation2 + $0x78] sm:$0xff]
    %v135 = vld [vmem:[#allocation3] sm:$0xf]
    %v136 = vld [vmem:[#allocation3 + $0x4] sm:$0xf]
    %v137 = vld [vmem:[#allocation3 + $0x8] sm:$0xf]
    %v138 = vld [vmem:[#allocation3 + $0xc] sm:$0xf]
    %v139 = vld [vmem:[#allocation3 + $0x10] sm:$0xf]
    %v140 = vld [vmem:[#allocation3 + $0x14] sm:$0xf]
    %v141 = vld [vmem:[#allocation3 + $0x18] sm:$0xf]
    %v142 = vld [vmem:[#allocation3 + $0x1c] sm:$0xf]
    %v143 = vld [vmem:[#allocation3 + $0x20] sm:$0xf]
    %v144 = vld [vmem:[#allocation3 + $0x24] sm:$0xf]
    %v145 = vld [vmem:[#allocation3 + $0x28] sm:$0xf]
    %v146 = vld [vmem:[#allocation3 + $0x2c] sm:$0xf]
    %v147 = vld [vmem:[#allocation3 + $0x30] sm:$0xf]
    %v148 = vld [vmem:[#allocation3 + $0x34] sm:$0xf]
    %v149 = vld [vmem:[#allocation3 + $0x38] sm:$0xf]
    %v150 = vld [vmem:[#allocation3 + $0x3c] sm:$0xf]
    %v151 = vld [vmem:[#allocation6] sm:$0xf]
    %v152 = vld [vmem:[#allocation6 + $0x4] sm:$0xf]
    %v153 = vld [vmem:[#allocation6 + $0x8] sm:$0xf]
    %v154 = vld [vmem:[#allocation6 + $0xc] sm:$0xf]
    %v155 = vld [vmem:[#allocation6 + $0x10] sm:$0xf]
    %v156 = vld [vmem:[#allocation6 + $0x14] sm:$0xf]
    %v157 = vld [vmem:[#allocation6 + $0x18] sm:$0xf]
    %v158 = vld [vmem:[#allocation6 + $0x1c] sm:$0xf]
    %v159 = vld [vmem:[#allocation6 + $0x20] sm:$0xf]
    %v160 = vld [vmem:[#allocation6 + $0x24] sm:$0xf]
    %v161 = vld [vmem:[#allocation6 + $0x28] sm:$0xf]
    %v162 = vld [vmem:[#allocation6 + $0x2c] sm:$0xf]
    %v163 = vld [vmem:[#allocation6 + $0x30] sm:$0xf]
    %v164 = vld [vmem:[#allocation6 + $0x34] sm:$0xf]
    %v165 = vld [vmem:[#allocation6 + $0x38] sm:$0xf]
    %v166 = vld [vmem:[#allocation6 + $0x3c] sm:$0xf]
    %v183 = vunpack.c.l.b16 %v135
    %v184 = vunpack.c.l.b16 %v136
    %v185 = vunpack.c.l.b16 %v137
    %v186 = vunpack.c.l.b16 %v138
    %v187 = vunpack.c.l.b16 %v139
    %v188 = vunpack.c.l.b16 %v140
    %v189 = vunpack.c.l.b16 %v141
    %v190 = vunpack.c.l.b16 %v142
    %v191 = vunpack.c.l.b16 %v143
    %v192 = vunpack.c.l.b16 %v144
    %v193 = vunpack.c.l.b16 %v145
    %v194 = vunpack.c.l.b16 %v146
    %v195 = vunpack.c.l.b16 %v147
    %v196 = vunpack.c.l.b16 %v148
    %v197 = vunpack.c.l.b16 %v149
    %v198 = vunpack.c.l.b16 %v150
    %v199 = vpack.c.b16 %v184, %v183
    %v200 = vpack.c.b16 %v186, %v185
    %v201 = vpack.c.b16 %v188, %v187
    %v202 = vpack.c.b16 %v190, %v189
    %v203 = vpack.c.b16 %v192, %v191
    %v204 = vpack.c.b16 %v194, %v193
    %v205 = vpack.c.b16 %v196, %v195
    %v206 = vpack.c.b16 %v198, %v197
    %v231 = vunpack.c.l.b16 %v151
    %v232 = vunpack.c.l.b16 %v152
    %v233 = vunpack.c.l.b16 %v153
    %v234 = vunpack.c.l.b16 %v154
    %v235 = vunpack.c.l.b16 %v155
    %v236 = vunpack.c.l.b16 %v156
    %v237 = vunpack.c.l.b16 %v157
    %v238 = vunpack.c.l.b16 %v158
    %v239 = vunpack.c.l.b16 %v159
    %v240 = vunpack.c.l.b16 %v160
    %v241 = vunpack.c.l.b16 %v161
    %v242 = vunpack.c.l.b16 %v162
    %v243 = vunpack.c.l.b16 %v163
    %v244 = vunpack.c.l.b16 %v164
    %v245 = vunpack.c.l.b16 %v165
    %v246 = vunpack.c.l.b16 %v166
    %v247 = vpack.c.b16 %v232, %v231
    %v248 = vpack.c.b16 %v234, %v233
    %v249 = vpack.c.b16 %v236, %v235
    %v250 = vpack.c.b16 %v238, %v237
    %v251 = vpack.c.b16 %v240, %v239
    %v252 = vpack.c.b16 %v242, %v241
    %v253 = vpack.c.b16 %v244, %v243
    %v254 = vpack.c.b16 %v246, %v245
    %263 = vmatpush.bf16.msra.mxu0 %v254
    %264 = vmatpush.bf16.msra.mxu0 %v253
    %265 = vmatpush.bf16.msra.mxu0 %v252
    %266 = vmatpush.bf16.msra.mxu0 %v251
    %267 = vmatpush.bf16.msra.mxu0 %v250
    %268 = vmatpush.bf16.msra.mxu0 %v249
    %269 = vmatpush.bf16.msra.mxu0 %v248
    %270 = vmatpush.bf16.msra.mxu0 %v247
    %271 = vmatmul.bf16.gmra.mxu0 %v199
    %v272 = vpop.f32.mrf.mxu0
    %v273 = vadd.f32 0.0, %v272
    %v274 = vpop.f32.mrf.mxu0
    %v275 = vadd.f32 0.0, %v274
    %276 = vmatmul.bf16.gmra.mxu0 %v200
    %v277 = vpop.f32.mrf.mxu0
    %v278 = vadd.f32 0.0, %v277
    %v279 = vpop.f32.mrf.mxu0
    %v280 = vadd.f32 0.0, %v279
    %281 = vmatmul.bf16.gmra.mxu0 %v201
    %v282 = vpop.f32.mrf.mxu0
    %v283 = vadd.f32 0.0, %v282
    %v284 = vpop.f32.mrf.mxu0
    %v285 = vadd.f32 0.0, %v284
    %286 = vmatmul.bf16.gmra.mxu0 %v202
    %v287 = vpop.f32.mrf.mxu0
    %v288 = vadd.f32 0.0, %v287
    %v289 = vpop.f32.mrf.mxu0
    %v290 = vadd.f32 0.0, %v289
    %291 = vmatmul.bf16.gmra.mxu0 %v203
    %v292 = vpop.f32.mrf.mxu0
    %v293 = vadd.f32 0.0, %v292
    %v294 = vpop.f32.mrf.mxu0
    %v295 = vadd.f32 0.0, %v294
    %296 = vmatmul.bf16.gmra.mxu0 %v204
    %v297 = vpop.f32.mrf.mxu0
    %v298 = vadd.f32 0.0, %v297
    %v299 = vpop.f32.mrf.mxu0
    %v300 = vadd.f32 0.0, %v299
    %301 = vmatmul.bf16.gmra.mxu0 %v205
    %v302 = vpop.f32.mrf.mxu0
    %v303 = vadd.f32 0.0, %v302
    %v304 = vpop.f32.mrf.mxu0
    %v305 = vadd.f32 0.0, %v304
    %306 = vmatmul.bf16.gmra.mxu0 %v206
    %v307 = vpop.f32.mrf.mxu0
    %v308 = vadd.f32 0.0, %v307
    %v309 = vpop.f32.mrf.mxu0
    %v310 = vadd.f32 0.0, %v309
    %311 = vdwg.mxu0
    %v312 = vadd.f32 %v119, %v273
    %v313 = vadd.f32 %v120, %v275
    %v314 = vadd.f32 %v121, %v278
    %v315 = vadd.f32 %v122, %v280
    %v316 = vadd.f32 %v123, %v283
    %v317 = vadd.f32 %v124, %v285
    %v318 = vadd.f32 %v125, %v288
    %v319 = vadd.f32 %v126, %v290
    %v320 = vadd.f32 %v127, %v293
    %v321 = vadd.f32 %v128, %v295
    %v322 = vadd.f32 %v129, %v298
    %v323 = vadd.f32 %v130, %v300
    %v324 = vadd.f32 %v131, %v303
    %v325 = vadd.f32 %v132, %v305
    %v326 = vadd.f32 %v133, %v308
    %v327 = vadd.f32 %v134, %v310
    %328 = vst [vmem:[#allocation2] sm:$0xff] %v312
    %329 = vst [vmem:[#allocation2 + $0x8] sm:$0xff] %v313
    %330 = vst [vmem:[#allocation2 + $0x10] sm:$0xff] %v314
    %331 = vst [vmem:[#allocation2 + $0x18] sm:$0xff] %v315
    %332 = vst [vmem:[#allocation2 + $0x20] sm:$0xff] %v316
    %333 = vst [vmem:[#allocation2 + $0x28] sm:$0xff] %v317
    %334 = vst [vmem:[#allocation2 + $0x30] sm:$0xff] %v318
    %335 = vst [vmem:[#allocation2 + $0x38] sm:$0xff] %v319
    %336 = vst [vmem:[#allocation2 + $0x40] sm:$0xff] %v320
    %337 = vst [vmem:[#allocation2 + $0x48] sm:$0xff] %v321
    %338 = vst [vmem:[#allocation2 + $0x50] sm:$0xff] %v322
    %339 = vst [vmem:[#allocation2 + $0x58] sm:$0xff] %v323
    %340 = vst [vmem:[#allocation2 + $0x60] sm:$0xff] %v324
    %341 = vst [vmem:[#allocation2 + $0x68] sm:$0xff] %v325
    %342 = vst [vmem:[#allocation2 + $0x70] sm:$0xff] %v326
    %343 = vst [vmem:[#allocation2 + $0x78] sm:$0xff] %v327
    // Predicated region
    $region46: #{tpu_custom_call.1} parent=1 // pred_check
      %p344 = pneg %p99
    $region47: #{tpu_custom_call.1} parent=1 // pred_check_branch
      %346 = sbr.rel (%p344) target = $region49
    $region48: #{tpu_custom_call.1} parent=1 // pred_region
      %v347 = vld [vmem:[#allocation2] sm:$0xff]
      %v348 = vld [vmem:[#allocation2 + $0x8] sm:$0xff]
      %v349 = vld [vmem:[#allocation2 + $0x10] sm:$0xff]
      %v350 = vld [vmem:[#allocation2 + $0x18] sm:$0xff]
      %v351 = vld [vmem:[#allocation2 + $0x20] sm:$0xff]
      %v352 = vld [vmem:[#allocation2 + $0x28] sm:$0xff]
      %v353 = vld [vmem:[#allocation2 + $0x30] sm:$0xff]
      %v354 = vld [vmem:[#allocation2 + $0x38] sm:$0xff]
      %v355 = vld [vmem:[#allocation2 + $0x40] sm:$0xff]
      %v356 = vld [vmem:[#allocation2 + $0x48] sm:$0xff]
      %v357 = vld [vmem:[#allocation2 + $0x50] sm:$0xff]
      %v358 = vld [vmem:[#allocation2 + $0x58] sm:$0xff]
      %v359 = vld [vmem:[#allocation2 + $0x60] sm:$0xff]
      %v360 = vld [vmem:[#allocation2 + $0x68] sm:$0xff]
      %v361 = vld [vmem:[#allocation2 + $0x70] sm:$0xff]
      %v362 = vld [vmem:[#allocation2 + $0x78] sm:$0xff]
      %v363 = vpack.c.bf16 %v348, %v347
      %v364 = vpack.c.bf16 %v350, %v349
      %v365 = vpack.c.bf16 %v352, %v351
      %v366 = vpack.c.bf16 %v354, %v353
      %v367 = vpack.c.bf16 %v356, %v355
      %v368 = vpack.c.bf16 %v358, %v357
      %v369 = vpack.c.bf16 %v360, %v359
      %v370 = vpack.c.bf16 %v362, %v361
      %v371 = vld [vmem:[#allocation9] sm:$0xf]
      %v372 = vld [vmem:[#allocation9 + $0x4] sm:$0xf]
      %v373 = vld [vmem:[#allocation9 + $0x8] sm:$0xf]
      %v374 = vld [vmem:[#allocation9 + $0xc] sm:$0xf]
      %v375 = vld [vmem:[#allocation9 + $0x10] sm:$0xf]
      %v376 = vld [vmem:[#allocation9 + $0x14] sm:$0xf]
      %v377 = vld [vmem:[#allocation9 + $0x18] sm:$0xf]
      %v378 = vld [vmem:[#allocation9 + $0x1c] sm:$0xf]
      %v379 = vld [vmem:[#allocation9 + $0x20] sm:$0xf]
      %v380 = vld [vmem:[#allocation9 + $0x24] sm:$0xf]
      %v381 = vld [vmem:[#allocation9 + $0x28] sm:$0xf]
      %v382 = vld [vmem:[#allocation9 + $0x2c] sm:$0xf]
      %v383 = vld [vmem:[#allocation9 + $0x30] sm:$0xf]
      %v384 = vld [vmem:[#allocation9 + $0x34] sm:$0xf]
      %v385 = vld [vmem:[#allocation9 + $0x38] sm:$0xf]
      %v386 = vld [vmem:[#allocation9 + $0x3c] sm:$0xf]
      %v387 = vld [vmem:[#allocation8] sm:$0xf]
      %v388 = vld [vmem:[#allocation8 + $0x4] sm:$0xf]
      %v389 = vld [vmem:[#allocation8 + $0x8] sm:$0xf]
      %v390 = vld [vmem:[#allocation8 + $0xc] sm:$0xf]
      %v391 = vld [vmem:[#allocation8 + $0x10] sm:$0xf]
      %v392 = vld [vmem:[#allocation8 + $0x14] sm:$0xf]
      %v393 = vld [vmem:[#allocation8 + $0x18] sm:$0xf]
      %v394 = vld [vmem:[#allocation8 + $0x1c] sm:$0xf]
      %v395 = vld [vmem:[#allocation8 + $0x20] sm:$0xf]
      %v396 = vld [vmem:[#allocation8 + $0x24] sm:$0xf]
      %v397 = vld [vmem:[#allocation8 + $0x28] sm:$0xf]
      %v398 = vld [vmem:[#allocation8 + $0x2c] sm:$0xf]
      %v399 = vld [vmem:[#allocation8 + $0x30] sm:$0xf]
      %v400 = vld [vmem:[#allocation8 + $0x34] sm:$0xf]
      %v401 = vld [vmem:[#allocation8 + $0x38] sm:$0xf]
      %v402 = vld [vmem:[#allocation8 + $0x3c] sm:$0xf]
      %v403 = vld [vmem:[#allocation11] sm:$0xf]
      %v404 = vld [vmem:[#allocation11 + $0x4] sm:$0xf]
      %v405 = vld [vmem:[#allocation11 + $0x8] sm:$0xf]
      %v406 = vld [vmem:[#allocation11 + $0xc] sm:$0xf]
      %v407 = vld [vmem:[#allocation11 + $0x10] sm:$0xf]
      %v408 = vld [vmem:[#allocation11 + $0x14] sm:$0xf]
      %v409 = vld [vmem:[#allocation11 + $0x18] sm:$0xf]
      %v410 = vld [vmem:[#allocation11 + $0x1c] sm:$0xf]
      %v411 = vld [vmem:[#allocation11 + $0x20] sm:$0xf]
      %v412 = vld [vmem:[#allocation11 + $0x24] sm:$0xf]
      %v413 = vld [vmem:[#allocation11 + $0x28] sm:$0xf]
      %v414 = vld [vmem:[#allocation11 + $0x2c] sm:$0xf]
      %v415 = vld [vmem:[#allocation11 + $0x30] sm:$0xf]
      %v416 = vld [vmem:[#allocation11 + $0x34] sm:$0xf]
      %v417 = vld [vmem:[#allocation11 + $0x38] sm:$0xf]
      %v418 = vld [vmem:[#allocation11 + $0x3c] sm:$0xf]
      %v435 = vunpack.c.l.b16 %v387
      %v436 = vunpack.c.l.b16 %v388
      %v437 = vunpack.c.l.b16 %v389
      %v438 = vunpack.c.l.b16 %v390
      %v439 = vunpack.c.l.b16 %v391
      %v440 = vunpack.c.l.b16 %v392
      %v441 = vunpack.c.l.b16 %v393
      %v442 = vunpack.c.l.b16 %v394
      %v443 = vunpack.c.l.b16 %v395
      %v444 = vunpack.c.l.b16 %v396
      %v445 = vunpack.c.l.b16 %v397
      %v446 = vunpack.c.l.b16 %v398
      %v447 = vunpack.c.l.b16 %v399
      %v448 = vunpack.c.l.b16 %v400
      %v449 = vunpack.c.l.b16 %v401
      %v450 = vunpack.c.l.b16 %v402
      %v451 = vpack.c.b16 %v436, %v435
      %v452 = vpack.c.b16 %v438, %v437
      %v453 = vpack.c.b16 %v440, %v439
      %v454 = vpack.c.b16 %v442, %v441
      %v455 = vpack.c.b16 %v444, %v443
      %v456 = vpack.c.b16 %v446, %v445
      %v457 = vpack.c.b16 %v448, %v447
      %v458 = vpack.c.b16 %v450, %v449
      %v483 = vunpack.c.l.b16 %v403
      %v484 = vunpack.c.l.b16 %v404
      %v485 = vunpack.c.l.b16 %v405
      %v486 = vunpack.c.l.b16 %v406
      %v487 = vunpack.c.l.b16 %v407
      %v488 = vunpack.c.l.b16 %v408
      %v489 = vunpack.c.l.b16 %v409
      %v490 = vunpack.c.l.b16 %v410
      %v491 = vunpack.c.l.b16 %v411
      %v492 = vunpack.c.l.b16 %v412
      %v493 = vunpack.c.l.b16 %v413
      %v494 = vunpack.c.l.b16 %v414
      %v495 = vunpack.c.l.b16 %v415
      %v496 = vunpack.c.l.b16 %v416
      %v497 = vunpack.c.l.b16 %v417
      %v498 = vunpack.c.l.b16 %v418
      %v499 = vpack.c.b16 %v484, %v483
      %v500 = vpack.c.b16 %v486, %v485
      %v501 = vpack.c.b16 %v488, %v487
      %v502 = vpack.c.b16 %v490, %v489
      %v503 = vpack.c.b16 %v492, %v491
      %v504 = vpack.c.b16 %v494, %v493
      %v505 = vpack.c.b16 %v496, %v495
      %v506 = vpack.c.b16 %v498, %v497
      %515 = vmatpush.bf16.msra.mxu0 %v506
      %516 = vmatpush.bf16.msra.mxu0 %v505
      %517 = vmatpush.bf16.msra.mxu0 %v504
      %518 = vmatpush.bf16.msra.mxu0 %v503
      %519 = vmatpush.bf16.msra.mxu0 %v502
      %520 = vmatpush.bf16.msra.mxu0 %v501
      %521 = vmatpush.bf16.msra.mxu0 %v500
      %522 = vmatpush.bf16.msra.mxu0 %v499
      %523 = vmatmul.bf16.gmra.mxu0 %v451
      %v524 = vpop.f32.mrf.mxu0
      %v525 = vadd.f32 0.0, %v524
      %v526 = vpop.f32.mrf.mxu0
      %v527 = vadd.f32 0.0, %v526
      %528 = vmatmul.bf16.gmra.mxu0 %v452
      %v529 = vpop.f32.mrf.mxu0
      %v530 = vadd.f32 0.0, %v529
      %v531 = vpop.f32.mrf.mxu0
      %v532 = vadd.f32 0.0, %v531
      %533 = vmatmul.bf16.gmra.mxu0 %v453
      %v534 = vpop.f32.mrf.mxu0
      %v535 = vadd.f32 0.0, %v534
      %v536 = vpop.f32.mrf.mxu0
      %v537 = vadd.f32 0.0, %v536
      %538 = vmatmul.bf16.gmra.mxu0 %v454
      %v539 = vpop.f32.mrf.mxu0
      %v540 = vadd.f32 0.0, %v539
      %v541 = vpop.f32.mrf.mxu0
      %v542 = vadd.f32 0.0, %v541
      %543 = vmatmul.bf16.gmra.mxu0 %v455
      %v544 = vpop.f32.mrf.mxu0
      %v545 = vadd.f32 0.0, %v544
      %v546 = vpop.f32.mrf.mxu0
      %v547 = vadd.f32 0.0, %v546
      %548 = vmatmul.bf16.gmra.mxu0 %v456
      %v549 = vpop.f32.mrf.mxu0
      %v550 = vadd.f32 0.0, %v549
      %v551 = vpop.f32.mrf.mxu0
      %v552 = vadd.f32 0.0, %v551
      %553 = vmatmul.bf16.gmra.mxu0 %v457
      %v554 = vpop.f32.mrf.mxu0
      %v555 = vadd.f32 0.0, %v554
      %v556 = vpop.f32.mrf.mxu0
      %v557 = vadd.f32 0.0, %v556
      %558 = vmatmul.bf16.gmra.mxu0 %v458
      %v559 = vpop.f32.mrf.mxu0
      %v560 = vadd.f32 0.0, %v559
      %v561 = vpop.f32.mrf.mxu0
      %v562 = vadd.f32 0.0, %v561
      %563 = vdwg.mxu0
      %v580 = vunpack.c.l.b16 %v371
      %v581 = vunpack.c.l.b16 %v372
      %v582 = vunpack.c.l.b16 %v373
      %v583 = vunpack.c.l.b16 %v374
      %v584 = vunpack.c.l.b16 %v375
      %v585 = vunpack.c.l.b16 %v376
      %v586 = vunpack.c.l.b16 %v377
      %v587 = vunpack.c.l.b16 %v378
      %v588 = vunpack.c.l.b16 %v379
      %v589 = vunpack.c.l.b16 %v380
      %v590 = vunpack.c.l.b16 %v381
      %v591 = vunpack.c.l.b16 %v382
      %v592 = vunpack.c.l.b16 %v383
      %v593 = vunpack.c.l.b16 %v384
      %v594 = vunpack.c.l.b16 %v385
      %v595 = vunpack.c.l.b16 %v386
      %v596 = vpack.c.b16 %v581, %v580
      %v597 = vpack.c.b16 %v583, %v582
      %v598 = vpack.c.b16 %v585, %v584
      %v599 = vpack.c.b16 %v587, %v586
      %v600 = vpack.c.b16 %v589, %v588
      %v601 = vpack.c.b16 %v591, %v590
      %v602 = vpack.c.b16 %v593, %v592
      %v603 = vpack.c.b16 %v595, %v594
      %612 = vmatpush.bf16.msra.mxu0 %v603
      %613 = vmatpush.bf16.msra.mxu0 %v602
      %614 = vmatpush.bf16.msra.mxu0 %v601
      %615 = vmatpush.bf16.msra.mxu0 %v600
      %616 = vmatpush.bf16.msra.mxu0 %v599
      %617 = vmatpush.bf16.msra.mxu0 %v598
      %618 = vmatpush.bf16.msra.mxu0 %v597
      %619 = vmatpush.bf16.msra.mxu0 %v596
      %620 = vmatmul.bf16.gmra.mxu0 %v363
      %v621 = vpop.f32.mrf.mxu0
      %v622 = vadd.f32 %v525, %v621
      %v623 = vpop.f32.mrf.mxu0
      %v624 = vadd.f32 %v527, %v623
      %625 = vmatmul.bf16.gmra.mxu0 %v364
      %v626 = vpop.f32.mrf.mxu0
      %v627 = vadd.f32 %v530, %v626
      %v628 = vpop.f32.mrf.mxu0
      %v629 = vadd.f32 %v532, %v628
      %630 = vmatmul.bf16.gmra.mxu0 %v365
      %v631 = vpop.f32.mrf.mxu0
      %v632 = vadd.f32 %v535, %v631
      %v633 = vpop.f32.mrf.mxu0
      %v634 = vadd.f32 %v537, %v633
      %635 = vmatmul.bf16.gmra.mxu0 %v366
      %v636 = vpop.f32.mrf.mxu0
      %v637 = vadd.f32 %v540, %v636
      %v638 = vpop.f32.mrf.mxu0
      %v639 = vadd.f32 %v542, %v638
      %640 = vmatmul.bf16.gmra.mxu0 %v367
      %v641 = vpop.f32.mrf.mxu0
      %v642 = vadd.f32 %v545, %v641
      %v643 = vpop.f32.mrf.mxu0
      %v644 = vadd.f32 %v547, %v643
      %645 = vmatmul.bf16.gmra.mxu0 %v368
      %v646 = vpop.f32.mrf.mxu0
      %v647 = vadd.f32 %v550, %v646
      %v648 = vpop.f32.mrf.mxu0
      %v649 = vadd.f32 %v552, %v648
      %650 = vmatmul.bf16.gmra.mxu0 %v369
      %v651 = vpop.f32.mrf.mxu0
      %v652 = vadd.f32 %v555, %v651
      %v653 = vpop.f32.mrf.mxu0
      %v654 = vadd.f32 %v557, %v653
      %655 = vmatmul.bf16.gmra.mxu0 %v370
      %v656 = vpop.f32.mrf.mxu0
      %v657 = vadd.f32 %v560, %v656
      %v658 = vpop.f32.mrf.mxu0
      %v659 = vadd.f32 %v562, %v658
      %660 = vdwg.mxu0
      %v661 = vmax.f32 %v622, 0.0
      %v662 = vmax.f32 %v624, 0.0
      %v663 = vmax.f32 %v627, 0.0
      %v664 = vmax.f32 %v629, 0.0
      %v665 = vmax.f32 %v632, 0.0
      %v666 = vmax.f32 %v634, 0.0
      %v667 = vmax.f32 %v637, 0.0
      %v668 = vmax.f32 %v639, 0.0
      %v669 = vmax.f32 %v642, 0.0
      %v670 = vmax.f32 %v644, 0.0
      %v671 = vmax.f32 %v647, 0.0
      %v672 = vmax.f32 %v649, 0.0
      %v673 = vmax.f32 %v652, 0.0
      %v674 = vmax.f32 %v654, 0.0
      %v675 = vmax.f32 %v657, 0.0
      %v676 = vmax.f32 %v659, 0.0
      %v677 = vpack.c.bf16 %v661, %v661
      %v678 = vpack.c.bf16 %v662, %v662
      %v679 = vpack.c.bf16 %v663, %v663
      %v680 = vpack.c.bf16 %v664, %v664
      %v681 = vpack.c.bf16 %v665, %v665
      %v682 = vpack.c.bf16 %v666, %v666
      %v683 = vpack.c.bf16 %v667, %v667
      %v684 = vpack.c.bf16 %v668, %v668
      %v685 = vpack.c.bf16 %v669, %v669
      %v686 = vpack.c.bf16 %v670, %v670
      %v687 = vpack.c.bf16 %v671, %v671
      %v688 = vpack.c.bf16 %v672, %v672
      %v689 = vpack.c.bf16 %v673, %v673
      %v690 = vpack.c.bf16 %v674, %v674
      %v691 = vpack.c.bf16 %v675, %v675
      %v692 = vpack.c.bf16 %v676, %v676
      %693 = vst [vmem:[#allocation12] sm:$0xf] %v677
      %694 = vst [vmem:[#allocation12 + $0x4] sm:$0xf] %v678
      %695 = vst [vmem:[#allocation12 + $0x8] sm:$0xf] %v679
      %696 = vst [vmem:[#allocation12 + $0xc] sm:$0xf] %v680
      %697 = vst [vmem:[#allocation12 + $0x10] sm:$0xf] %v681
      %698 = vst [vmem:[#allocation12 + $0x14] sm:$0xf] %v682
      %699 = vst [vmem:[#allocation12 + $0x18] sm:$0xf] %v683
      %700 = vst [vmem:[#allocation12 + $0x1c] sm:$0xf] %v684
      %701 = vst [vmem:[#allocation12 + $0x20] sm:$0xf] %v685
      %702 = vst [vmem:[#allocation12 + $0x24] sm:$0xf] %v686
      %703 = vst [vmem:[#allocation12 + $0x28] sm:$0xf] %v687
      %704 = vst [vmem:[#allocation12 + $0x2c] sm:$0xf] %v688
      %705 = vst [vmem:[#allocation12 + $0x30] sm:$0xf] %v689
      %706 = vst [vmem:[#allocation12 + $0x34] sm:$0xf] %v690
      %707 = vst [vmem:[#allocation12 + $0x38] sm:$0xf] %v691
      %708 = vst [vmem:[#allocation12 + $0x3c] sm:$0xf] %v692
    $region49: #{tpu_custom_call.1} parent=1 // pred_fallthru
      _
    // Predicated region
    $region50: #{tpu_custom_call.1} parent=1 // pred_check
      _
    $region51: #{tpu_custom_call.1} parent=1 // pred_check_branch
      %710 = sbr.rel (0) target = $region53
    $region52: #{tpu_custom_call.1} parent=1 // pred_region
      %712 = vsyncadd [#allocation5], 0
      %s713 = sshll.u32 [#allocation12], 4
      %s714 = int_to_ptr.vmem [resolvable:$true] %s713
      %s715 = sshll.u32 %s5, 4
      %s716 = int_to_ptr.hbm [resolvable:$true] %s715
      %721 = dma.vmem_to_hbm [thread:$0]  %s714, 1024, %s716, [#allocation5], 64, 64, 4
    $region53: #{tpu_custom_call.1} parent=1 // pred_fallthru
      _
    // Predicated region
    $region54: #{tpu_custom_call.1} parent=1 // pred_check
      _
    $region55: #{tpu_custom_call.1} parent=1 // pred_check_branch
      %723 = sbr.rel (0) target = $region57
    $region56: #{tpu_custom_call.1} parent=1 // pred_region
      %725 = dma.done [#allocation5], 1024
    $region57: #{tpu_custom_call.1} parent=1 // pred_fallthru
      _
    %726 = vsyncpa [#allocation4], 1
    %727 = vsyncpa [#allocation7], 1
    %728 = vsyncpa [#allocation10], 1
    %729 = vsyncpa [#allocation5], 1

</llo_original>
